<compile_context>
chip_gen: v7x
topology: tpu7x:2x2x1
jax: 0.10.0
libtpu: 0.0.40
codegen_flags: <defaults>
</compile_context>

<pallas_src>
import jax
import jax.numpy as jnp
from jax.experimental import pallas as pl
from jax.experimental.pallas import tpu as pltpu

# Hyperparameters (the PyTorch module leaves D_in1/D_in2/K/D_out as globals;
# we pick small deterministic values consistent with the forward pass).
D_IN1 = 16    # rating feature dim
D_IN2 = 24    # truster / trustee feature dim
K     = 32    # hidden dim per branch
D_OUT = 8     # output dim
BATCH = 1024  # batch size for the demo (exercises a multi-step batch grid)

LANE = 128    # TPU lane width


def trustnet_kernel(x_ref, wblk_ref, bblk_ref, wo_ref, bo_ref, out_ref):
    """One batch tile: sigmoid(x @ Wblk + bblk) @ Wo + bo (narrow output)."""
    # Fused "three branches" matmul: Wblk is block-diagonal, so hidden columns
    # [0:K) only see rating features, [K:2K) truster, [2K:3K) trustee; columns
    # [3K:128) are zero-padding whose Wo rows are zero.
    h = jnp.dot(x_ref[...], wblk_ref[...], preferred_element_type=jnp.float32)
    h = jax.nn.sigmoid(h + bblk_ref[...])                       # f32, EUP sigmoid
    # Output projection straight to the narrow (TB, D_OUT) block.
    y = jnp.dot(h.astype(wo_ref.dtype), wo_ref[...],
                preferred_element_type=jnp.float32)
    out_ref[...] = (y + bo_ref[...]).astype(out_ref.dtype)


def prepare_params(params):
    """One-time packing of the four Linear layers into kernel operands.

    Returns (wblk_bf16 (64,128), bblk_f32 (1,128), wo_bf16 (128,D_out),
             bo_f32 (1,D_out)).  Call once per parameter set, not per forward.
    """
    w1, b1, w2, b2, w3, b3, wo, bo = params
    d1, k = w1.shape
    d2 = w2.shape[0]
    d_in = d1 + 2 * d2                                   # 64
    d_out = wo.shape[1]
    n_hid = 3 * k                                        # 96
    h_pad = ((n_hid + LANE - 1) // LANE) * LANE          # 128 (lane-dense hidden)

    wblk = jnp.zeros((d_in, h_pad), jnp.float32)
    wblk = wblk.at[:d1, :k].set(w1)
    wblk = wblk.at[d1:d1 + d2, k:2 * k].set(w2)
    wblk = wblk.at[d1 + d2:, 2 * k:n_hid].set(w3)
    bblk = jnp.zeros((1, h_pad), jnp.float32).at[:, :n_hid].set(
        jnp.concatenate([b1, b2, b3], axis=1))
    # Padded hidden lanes get sigmoid(0)=0.5 but their Wo rows are zero, so
    # they contribute nothing to the output.
    wo_pad = jnp.zeros((h_pad, d_out), jnp.float32).at[:n_hid, :].set(wo)

    return (wblk.astype(jnp.bfloat16), bblk,
            wo_pad.astype(jnp.bfloat16), bo.astype(jnp.float32))


def trustnet_forward(rating, truster, trustee, prepared, *, tb=None):
    """Pallas forward.  `prepared` comes from prepare_params(params)."""
    wblk_b, bblk, wo_b, bo = prepared
    B = rating.shape[0]
    d_in = rating.shape[1] + truster.shape[1] + trustee.shape[1]   # 64
    h_pad = wblk_b.shape[1]                                        # 128
    d_out = wo_b.shape[1]                                          # 8

    # bf16 concat: the cast fuses into the concat, so only one (B, 64) bf16
    # intermediate is materialized.
    x = jnp.concatenate([rating.astype(jnp.bfloat16),
                         truster.astype(jnp.bfloat16),
                         trustee.astype(jnp.bfloat16)], axis=1)

    # --- Batch tiling --------------------------------------------------------
    # Round tiles / padding to multiples of 16 (bf16 packs 16 sublanes/vreg).
    # Default TB=256 for B<=2048 (>=2 grid steps per TensorCore on v7x, so the
    # pipeline can overlap DMA and MXU); larger tiles once B is huge to
    # amortize the ~0.35us/step overhead on single-TC chips.
    if tb is None:
        tb = 256 if B <= 2048 else 1024
    TB = min(tb, max(16, ((B + 15) // 16) * 16))
    Bp = ((B + TB - 1) // TB) * TB
    if Bp != B:
        x = jnp.pad(x, ((0, Bp - B), (0, 0)))

    cost = pl.CostEstimate(
        flops=2 * Bp * (d_in * h_pad + h_pad * d_out),
        transcendentals=Bp * h_pad,
        bytes_accessed=Bp * (d_in * 2 + d_out * 4)
        + wblk_b.size * 2 + wo_b.size * 2 + bblk.size * 4 + bo.size * 4,
    )

    grid = (Bp // TB,)
    y = pl.pallas_call(
        trustnet_kernel,
        out_shape=jax.ShapeDtypeStruct((Bp, d_out), jnp.float32),
        grid=grid,
        in_specs=[
            pl.BlockSpec((TB, d_in), lambda i: (i, 0)),      # batch-tiled input
            pl.BlockSpec((d_in, h_pad), lambda i: (0, 0)),   # resident weights
            pl.BlockSpec((1, h_pad), lambda i: (0, 0)),
            pl.BlockSpec((h_pad, d_out), lambda i: (0, 0)),
            pl.BlockSpec((1, d_out), lambda i: (0, 0)),
        ],
        # Narrow output: last dim equals full array dim, so no 128-lane pad.
        out_specs=pl.BlockSpec((TB, d_out), lambda i: (i, 0)),
        compiler_params=pltpu.CompilerParams(
            dimension_semantics=("parallel",),               # v7x: shard over 2 TCs
        ),
        cost_estimate=cost,
    )(x, wblk_b, bblk, wo_b, bo)

    return y if Bp == B else y[:B]


def init_params(key):
    """Deterministic parameter init (shapes match the PyTorch module)."""
    ks = jax.random.split(key, 8)
    scale = 0.1
    w1 = scale * jax.random.normal(ks[0], (D_IN1, K), jnp.float32)
    b1 = scale * jax.random.normal(ks[1], (1, K), jnp.float32)
    w2 = scale * jax.random.normal(ks[2], (D_IN2, K), jnp.float32)
    b2 = scale * jax.random.normal(ks[3], (1, K), jnp.float32)
    w3 = scale * jax.random.normal(ks[4], (D_IN2, K), jnp.float32)
    b3 = scale * jax.random.normal(ks[5], (1, K), jnp.float32)
    wo = scale * jax.random.normal(ks[6], (3 * K, D_OUT), jnp.float32)
    bo = scale * jax.random.normal(ks[7], (1, D_OUT), jnp.float32)
    return (w1, b1, w2, b2, w3, b3, wo, bo)


def reference_forward_f32(rating, truster, trustee, params):
    """Pure-JAX f32 reference, mirrors the PyTorch forward exactly."""
    w1, b1, w2, b2, w3, b3, wo, bo = params
    x1 = jax.nn.sigmoid(rating @ w1 + b1)
    x2 = jax.nn.sigmoid(truster @ w2 + b2)
    x3 = jax.nn.sigmoid(trustee @ w3 + b3)
    x = jnp.concatenate([x1, x2, x3], axis=1)
    return x @ wo + bo


def reference_forward_bf16(rating, truster, trustee, params):
    """Reference mirroring the kernel's bf16-operand / f32-accumulate dots."""
    w1, b1, w2, b2, w3, b3, wo, bo = params
    bf = jnp.bfloat16
    dot = lambda a, w: jnp.dot(a.astype(bf), w.astype(bf),
                               preferred_element_type=jnp.float32)
    x1 = jax.nn.sigmoid(dot(rating, w1) + b1)
    x2 = jax.nn.sigmoid(dot(truster, w2) + b2)
    x3 = jax.nn.sigmoid(dot(trustee, w3) + b3)
    x = jnp.concatenate([x1, x2, x3], axis=1)
    return dot(x, wo) + bo


if __name__ == "__main__":
    key = jax.random.PRNGKey(0)
    k_in, k_par = jax.random.split(key)
    k_r, k_t1, k_t2 = jax.random.split(k_in, 3)

    rating  = jax.random.normal(k_r,  (BATCH, D_IN1), jnp.float32)
    truster = jax.random.normal(k_t1, (BATCH, D_IN2), jnp.float32)
    trustee = jax.random.normal(k_t2, (BATCH, D_IN2), jnp.float32)

    params = init_params(k_par)
    prepared = prepare_params(params)   # one-time weight packing

    y = trustnet_forward(rating, truster, trustee, prepared)
    y = jax.block_until_ready(y)
    assert y.shape == (BATCH, D_OUT)

    # Tight check against a reference that mirrors the kernel's bf16 dots.
    y_ref_bf16 = reference_forward_bf16(rating, truster, trustee, params)
    assert jnp.allclose(y, y_ref_bf16, atol=1e-3, rtol=1e-3), \
        "mismatch vs bf16-operand reference"

    # Loose check against the exact f32 PyTorch-equivalent forward
    # (bf16 MXU operands loosen the tolerance).
    y_ref_f32 = reference_forward_f32(rating, truster, trustee, params)
    assert jnp.allclose(y, y_ref_f32, atol=3e-2, rtol=3e-2), \
        "mismatch vs f32 reference"

    print("KERNEL_OK")
</pallas_src>

<mosaic_0001>
module attributes {stable_mosaic.version = 11 : i64} {
  func.func @trustnet_kernel(%arg0: i32, %arg1: memref<256x64xbf16, #tpu.memory_space<vmem>>, %arg2: memref<64x128xbf16, #tpu.memory_space<vmem>>, %arg3: memref<1x128xf32, #tpu.memory_space<vmem>>, %arg4: memref<128x8xbf16, #tpu.memory_space<vmem>>, %arg5: memref<1x8xf32, #tpu.memory_space<vmem>>, %arg6: memref<256x8xf32, #tpu.memory_space<vmem>>) attributes {dimension_semantics = [#tpu.dimension_semantics<parallel>], iteration_bounds = array<i64: 4>, scalar_prefetch = 0 : i64, scratch_operands = 0 : i64, tpu.core_type = #tpu.core_type<tc>, window_params = [{transform_indices = @transform_0, window_bounds = array<i64: 256, 64>}, {pipeline_mode = #tpu.pipeline_mode<synchronous>, transform_indices = @transform_1, window_bounds = array<i64: 64, 128>}, {pipeline_mode = #tpu.pipeline_mode<synchronous>, transform_indices = @transform_2, window_bounds = array<i64: 1, 128>}, {pipeline_mode = #tpu.pipeline_mode<synchronous>, transform_indices = @transform_3, window_bounds = array<i64: 128, 8>}, {pipeline_mode = #tpu.pipeline_mode<synchronous>, transform_indices = @transform_4, window_bounds = array<i64: 1, 8>}, {transform_indices = @transform_5, window_bounds = array<i64: 256, 8>}]} {
    %c0 = arith.constant 0 : index
    %c0_0 = arith.constant 0 : index
    %0 = vector.load %arg1[%c0, %c0_0] : memref<256x64xbf16, #tpu.memory_space<vmem>>, vector<256x64xbf16>
    %c0_1 = arith.constant 0 : index
    %c0_2 = arith.constant 0 : index
    %1 = vector.load %arg2[%c0_1, %c0_2] : memref<64x128xbf16, #tpu.memory_space<vmem>>, vector<64x128xbf16>
    %cst = arith.constant dense<0.000000e+00> : vector<256x128xf32>
    %2 = tpu.matmul %0, %1, %cst {dimension_numbers = #tpu.dot_dimension_numbers<[1], [0], [0], [1], [0, 0, 1, 1], [], []>} : vector<256x64xbf16>, vector<64x128xbf16>, vector<256x128xf32> -> vector<256x128xf32>
    %c0_3 = arith.constant 0 : index
    %c0_4 = arith.constant 0 : index
    %3 = vector.load %arg3[%c0_3, %c0_4] : memref<1x128xf32, #tpu.memory_space<vmem>>, vector<1x128xf32>
    %4 = vector.broadcast %3 : vector<1x128xf32> to vector<256x128xf32>
    %5 = arith.addf %2, %4 : vector<256x128xf32>
    %6 = arith.negf %5 : vector<256x128xf32>
    %7 = math.exp %6 : vector<256x128xf32>
    %cst_5 = arith.constant 1.000000e+00 : f32
    %8 = vector.broadcast %cst_5 : f32 to vector<256x128xf32>
    %9 = arith.addf %8, %7 : vector<256x128xf32>
    %10 = arith.divf %8, %9 : vector<256x128xf32>
    %11 = arith.truncf %10 : vector<256x128xf32> to vector<256x128xbf16>
    %c0_6 = arith.constant 0 : index
    %c0_7 = arith.constant 0 : index
    %12 = vector.load %arg4[%c0_6, %c0_7] : memref<128x8xbf16, #tpu.memory_space<vmem>>, vector<128x8xbf16>
    %cst_8 = arith.constant dense<0.000000e+00> : vector<256x8xf32>
    %13 = tpu.matmul %11, %12, %cst_8 {dimension_numbers = #tpu.dot_dimension_numbers<[1], [0], [0], [1], [0, 0, 1, 1], [], []>} : vector<256x128xbf16>, vector<128x8xbf16>, vector<256x8xf32> -> vector<256x8xf32>
    %c0_9 = arith.constant 0 : index
    %c0_10 = arith.constant 0 : index
    %14 = vector.load %arg5[%c0_9, %c0_10] : memref<1x8xf32, #tpu.memory_space<vmem>>, vector<1x8xf32>
    %15 = vector.broadcast %14 : vector<1x8xf32> to vector<256x8xf32>
    %16 = arith.addf %13, %15 : vector<256x8xf32>
    %c0_11 = arith.constant 0 : index
    %c0_12 = arith.constant 0 : index
    %17 = vector.load %arg6[%c0_11, %c0_12] : memref<256x8xf32, #tpu.memory_space<vmem>>, vector<256x8xf32>
    tpu.vector_store %arg6[%c0_11, %c0_12], %16 {strides = array<i32>} : memref<256x8xf32, #tpu.memory_space<vmem>>, vector<256x8xf32>,
    return
  }
  func.func @transform_0(%arg0: i32) -> (i32, i32) {
    %c0_i32 = arith.constant 0 : i32
    %c0_i32_0 = arith.constant 0 : i32
    return %arg0, %c0_i32 : i32, i32
  }
  func.func @transform_1(%arg0: i32) -> (i32, i32) {
    %c0_i32 = arith.constant 0 : i32
    %c0_i32_0 = arith.constant 0 : i32
    %c0_i32_1 = arith.constant 0 : i32
    return %c0_i32, %c0_i32_0 : i32, i32
  }
  func.func @transform_2(%arg0: i32) -> (i32, i32) {
    %c0_i32 = arith.constant 0 : i32
    %c0_i32_0 = arith.constant 0 : i32
    %c0_i32_1 = arith.constant 0 : i32
    return %c0_i32, %c0_i32_0 : i32, i32
  }
  func.func @transform_3(%arg0: i32) -> (i32, i32) {
    %c0_i32 = arith.constant 0 : i32
    %c0_i32_0 = arith.constant 0 : i32
    %c0_i32_1 = arith.constant 0 : i32
    return %c0_i32, %c0_i32_0 : i32, i32
  }
  func.func @transform_4(%arg0: i32) -> (i32, i32) {
    %c0_i32 = arith.constant 0 : i32
    %c0_i32_0 = arith.constant 0 : i32
    %c0_i32_1 = arith.constant 0 : i32
    return %c0_i32, %c0_i32_0 : i32, i32
  }
  func.func @transform_5(%arg0: i32) -> (i32, i32) {
    %c0_i32 = arith.constant 0 : i32
    %c0_i32_0 = arith.constant 0 : i32
    return %arg0, %c0_i32 : i32, i32
  }
}

</mosaic_0001>

<llo_original>
// kernel: tpu_custom_call.1
$region0: #{tpu_custom_call.1}
  #allocation0 [shape = 'u32[]', space=smem, size = 0x4, offset = 0x4, fixed_abs, tag = 'smem constant byte address 0x4 - core index']
  #allocation1 [shape = 'u32[144,128]{1,0:T(1,128)}', space=vmem, size = 0x12000, scoped, tag = 'internal scratch']
  %s0 = inlined_call_operand.vmem [shape: bf16[1024,64], index: 0, kind: input, shape index: {}]
  %s1 = inlined_call_operand.vmem [shape: bf16[64,128], index: 1, kind: input, shape index: {}]
  %s2 = inlined_call_operand.vmem [shape: f32[1,128], index: 2, kind: input, shape index: {}]
  %s3 = inlined_call_operand.vmem [shape: bf16[128,8], index: 3, kind: input, shape index: {}]
  %s4 = inlined_call_operand.vmem [shape: f32[1,8], index: 4, kind: input, shape index: {}]
  %s5 = inlined_call_operand.vmem [shape: f32[1024,8], index: 5, kind: output, shape index: {}]
  %s6 = sld [smem:[#allocation0]]
  $region53: #{tpu_custom_call.1} parent=0
    _
  %s8 = ssub.s32 1, %s6
  %s9 = scalar_select 0, %s8, %s6
  loop: start=0, step=1, limit=6
  $region2: #{tpu_custom_call.1} parent=0 // loop_pre_header
    _
  $region3: #{tpu_custom_call.1} parent=0 // loop_header
    %s11 = sphi 0, %s15
    %p12 = scmp.ge.s32.totalorder %s11, 6
    %s21 = sphi 0, %s23
    %s24 = sphi 0, %s21
    %s25 = sphi 0, %s24
    %s41 = sphi 0, %s25
    %s45 = sphi 0, %s45
    %s47 = sphi 0, %s45
    %s48 = sphi 0, %s47
    %s62 = sphi 0, %s48
    %s66 = sphi 0, %s66
    %s68 = sphi 0, %s66
    %s69 = sphi 0, %s68
    %s83 = sphi 0, %s69
    %s87 = sphi 0, %s87
    %s89 = sphi 0, %s87
    %s90 = sphi 0, %s89
    %s104 = sphi 0, %s90
    %s108 = sphi 0, %s108
    %s110 = sphi 0, %s108
    %s111 = sphi 0, %s110
    %s125 = sphi 0, %s111
    %s131 = sphi 0, %s133
    %s134 = sphi 0, %s131
    %s135 = sphi 0, %s134
    %s151 = sphi 0, %s135
  $region4: #{tpu_custom_call.1} parent=0 // loop_header_branch
    %14 = sbr.rel (%p12) target = $region8
  $region5: #{tpu_custom_call.1} parent=0 // loop_body
    %s16 = ssub.s32 %s11, 1
    %s17 = ssub.s32 %s11, 2
    %s18 = sadd.s32 %s11, 1
    %s19 = ssub.s32 %s11, %s18
    %p20 = scmp.eq.s32.totalorder %s19, 0
    %s22 = sadd.s32 %s21, 1
    %s23 = scalar_select %p20, %s21, %s22
    %p26 = pneg %p20
    %p27 = scmp.eq.s32.totalorder %s11, 3
    %p28 = por %p26, %p27
    %p29 = scmp.ne.s32.totalorder %s21, %s24
    %p30 = scmp.eq.s32.totalorder %s11, 0
    %p31 = por %p29, %p30
    %p32 = scmp.ne.s32.totalorder %s21, %s24
    %p33 = scmp.eq.s32.totalorder %s16, 3
    %p34 = por %p32, %p33
    %p35 = scmp.ne.s32.totalorder %s24, %s25
    %p36 = scmp.eq.s32.totalorder %s16, 0
    %p37 = por %p35, %p36
    %p38 = scmp.ne.s32.totalorder %s24, %s25
    %p39 = scmp.eq.s32.totalorder %s17, 3
    %p40 = por %p38, %p39
    %p42 = scmp.ne.s32.totalorder %s25, %s41
    %p43 = scmp.eq.s32.totalorder %s17, 0
    %p44 = por %p42, %p43
    %s46 = sadd.s32 %s45, 1
    %p49 = scmp.eq.s32.totalorder %s11, 3
    %p50 = scmp.ne.s32.totalorder %s45, %s47
    %p51 = scmp.eq.s32.totalorder %s11, 0
    %p52 = por %p50, %p51
    %p53 = scmp.ne.s32.totalorder %s45, %s47
    %p54 = scmp.eq.s32.totalorder %s16, 3
    %p55 = por %p53, %p54
    %p56 = scmp.ne.s32.totalorder %s47, %s48
    %p57 = scmp.eq.s32.totalorder %s16, 0
    %p58 = por %p56, %p57
    %p59 = scmp.ne.s32.totalorder %s47, %s48
    %p60 = scmp.eq.s32.totalorder %s17, 3
    %p61 = por %p59, %p60
    %p63 = scmp.ne.s32.totalorder %s48, %s62
    %p64 = scmp.eq.s32.totalorder %s17, 0
    %p65 = por %p63, %p64
    %s67 = sadd.s32 %s66, 1
    %p70 = scmp.eq.s32.totalorder %s11, 3
    %p71 = scmp.ne.s32.totalorder %s66, %s68
    %p72 = scmp.eq.s32.totalorder %s11, 0
    %p73 = por %p71, %p72
    %p74 = scmp.ne.s32.totalorder %s66, %s68
    %p75 = scmp.eq.s32.totalorder %s16, 3
    %p76 = por %p74, %p75
    %p77 = scmp.ne.s32.totalorder %s68, %s69
    %p78 = scmp.eq.s32.totalorder %s16, 0
    %p79 = por %p77, %p78
    %p80 = scmp.ne.s32.totalorder %s68, %s69
    %p81 = scmp.eq.s32.totalorder %s17, 3
    %p82 = por %p80, %p81
    %p84 = scmp.ne.s32.totalorder %s69, %s83
    %p85 = scmp.eq.s32.totalorder %s17, 0
    %p86 = por %p84, %p85
    %s88 = sadd.s32 %s87, 1
    %p91 = scmp.eq.s32.totalorder %s11, 3
    %p92 = scmp.ne.s32.totalorder %s87, %s89
    %p93 = scmp.eq.s32.totalorder %s11, 0
    %p94 = por %p92, %p93
    %p95 = scmp.ne.s32.totalorder %s87, %s89
    %p96 = scmp.eq.s32.totalorder %s16, 3
    %p97 = por %p95, %p96
    %p98 = scmp.ne.s32.totalorder %s89, %s90
    %p99 = scmp.eq.s32.totalorder %s16, 0
    %p100 = por %p98, %p99
    %p101 = scmp.ne.s32.totalorder %s89, %s90
    %p102 = scmp.eq.s32.totalorder %s17, 3
    %p103 = por %p101, %p102
    %p105 = scmp.ne.s32.totalorder %s90, %s104
    %p106 = scmp.eq.s32.totalorder %s17, 0
    %p107 = por %p105, %p106
    %s109 = sadd.s32 %s108, 1
    %p112 = scmp.eq.s32.totalorder %s11, 3
    %p113 = scmp.ne.s32.totalorder %s108, %s110
    %p114 = scmp.eq.s32.totalorder %s11, 0
    %p115 = por %p113, %p114
    %p116 = scmp.ne.s32.totalorder %s108, %s110
    %p117 = scmp.eq.s32.totalorder %s16, 3
    %p118 = por %p116, %p117
    %p119 = scmp.ne.s32.totalorder %s110, %s111
    %p120 = scmp.eq.s32.totalorder %s16, 0
    %p121 = por %p119, %p120
    %p122 = scmp.ne.s32.totalorder %s110, %s111
    %p123 = scmp.eq.s32.totalorder %s17, 3
    %p124 = por %p122, %p123
    %p126 = scmp.ne.s32.totalorder %s111, %s125
    %p127 = scmp.eq.s32.totalorder %s17, 0
    %p128 = por %p126, %p127
    %s129 = ssub.s32 %s11, %s18
    %p130 = scmp.eq.s32.totalorder %s129, 0
    %s132 = sadd.s32 %s131, 1
    %s133 = scalar_select %p130, %s131, %s132
    %p136 = pneg %p130
    %p137 = scmp.eq.s32.totalorder %s11, 3
    %p138 = por %p136, %p137
    %p139 = scmp.ne.s32.totalorder %s131, %s134
    %p140 = scmp.eq.s32.totalorder %s11, 0
    %p141 = por %p139, %p140
    %p142 = scmp.ne.s32.totalorder %s131, %s134
    %p143 = scmp.eq.s32.totalorder %s16, 3
    %p144 = por %p142, %p143
    %p145 = scmp.ne.s32.totalorder %s134, %s135
    %p146 = scmp.eq.s32.totalorder %s16, 0
    %p147 = por %p145, %p146
    %p148 = scmp.ne.s32.totalorder %s134, %s135
    %p149 = scmp.eq.s32.totalorder %s17, 3
    %p150 = por %p148, %p149
    %p152 = scmp.ne.s32.totalorder %s135, %s151
    %p153 = scmp.eq.s32.totalorder %s17, 0
    %p154 = por %p152, %p153
    %p155 = scmp.le.s32.totalorder 1, %s11
    %p156 = scmp.lt.s32.totalorder %s11, 5
    %p157 = pnand %p155, %p156
    %p158 = pneg %p157
    // Predicated region
    $region9: #{tpu_custom_call.1} parent=5 // pred_check
      _
    $region10: #{tpu_custom_call.1} parent=5 // pred_check_branch
      %160 = sbr.rel (%p157) target = $region12
    $region11: #{tpu_custom_call.1} parent=5 // pred_region
      %s161 = ssub.s32 %s11, 1
      // Predicated region
      $region13: #{tpu_custom_call.1} parent=11 // pred_check
        %p162 = pneg %p58
      $region14: #{tpu_custom_call.1} parent=11 // pred_check_branch
        %164 = sbr.rel (%p162) target = $region16
      $region15: #{tpu_custom_call.1} parent=11 // pred_region
        _
      $region16: #{tpu_custom_call.1} parent=11 // pred_fallthru
        _
      // Predicated region
      $region17: #{tpu_custom_call.1} parent=11 // pred_check
        %p165 = pneg %p79
      $region18: #{tpu_custom_call.1} parent=11 // pred_check_branch
        %167 = sbr.rel (%p165) target = $region20
      $region19: #{tpu_custom_call.1} parent=11 // pred_region
        _
      $region20: #{tpu_custom_call.1} parent=11 // pred_fallthru
        _
      // Predicated region
      $region21: #{tpu_custom_call.1} parent=11 // pred_check
        %p168 = pneg %p100
      $region22: #{tpu_custom_call.1} parent=11 // pred_check_branch
        %170 = sbr.rel (%p168) target = $region24
      $region23: #{tpu_custom_call.1} parent=11 // pred_region
        _
      $region24: #{tpu_custom_call.1} parent=11 // pred_fallthru
        _
      // Predicated region
      $region25: #{tpu_custom_call.1} parent=11 // pred_check
        %p171 = pneg %p121
      $region26: #{tpu_custom_call.1} parent=11 // pred_check_branch
        %173 = sbr.rel (%p171) target = $region28
      $region27: #{tpu_custom_call.1} parent=11 // pred_region
        _
      $region28: #{tpu_custom_call.1} parent=11 // pred_fallthru
        _
    $region12: #{tpu_custom_call.1} parent=5 // pred_fallthru
      _
    %p174 = scmp.lt.s32.totalorder %s11, 4
    // Predicated region
    $region29: #{tpu_custom_call.1} parent=5 // pred_check
      %p175 = pneg %p174
    $region30: #{tpu_custom_call.1} parent=5 // pred_check_branch
      %177 = sbr.rel (%p175) target = $region32
    $region31: #{tpu_custom_call.1} parent=5 // pred_region
      // Predicated region
      $region33: #{tpu_custom_call.1} parent=31 // pred_check
        %p178 = pneg %p31
      $region34: #{tpu_custom_call.1} parent=31 // pred_check_branch
        %180 = sbr.rel (%p178) target = $region36
      $region35: #{tpu_custom_call.1} parent=31 // pred_region
        %s181 = smul.u32 32, %s11
        %p182 = scmp.lt.s32.totalorder %s181, 127
        %s183 = scalar_select %p182, %s181, 127
        %s184 = smul.addr %s183, 4
        %s185 = scalar_lea.vmem %s0, %s184
        %s186 = smul.u32 32, %s11
      $region36: #{tpu_custom_call.1} parent=31 // pred_fallthru
        _
    $region32: #{tpu_custom_call.1} parent=5 // pred_fallthru
      _
    %p187 = scmp.le.s32.totalorder 1, %s11
    %p188 = scmp.lt.s32.totalorder %s11, 5
    %p189 = pnand %p187, %p188
    %p190 = pneg %p189
    // Predicated region
    $region37: #{tpu_custom_call.1} parent=5 // pred_check
      _
    $region38: #{tpu_custom_call.1} parent=5 // pred_check_branch
      %192 = sbr.rel (%p189) target = $region40
    $region39: #{tpu_custom_call.1} parent=5 // pred_region
      %s193 = ssub.s32 %s11, 1
      %s194 = smul.u32 32, %s16
      %p195 = scmp.lt.s32.totalorder %s194, 127
      %s196 = scalar_select %p195, %s194, 127
      %s197 = smul.addr %s196, 4
      %s198 = scalar_lea.vmem %s0, %s197
      %p199 = pneg %p37
      %p200 = pneg %p34
      %p201 = pneg %p58
      %p202 = pneg %p55
      %p203 = pneg %p79
      %p204 = pneg %p76
      %p205 = pneg %p100
      %p206 = pneg %p97
      %p207 = pneg %p121
      %p208 = pneg %p118
      %p209 = pneg %p147
      %p210 = pneg %p144
      %s211 = smul.u32 32, %s16
      %p212 = scmp.lt.s32.totalorder %s211, 127
      %s213 = scalar_select %p212, %s211, 127
      %s214 = smul.addr %s213, 8
      %s215 = scalar_lea.vmem %s5, %s214
      %s216 = smul.u32 32, %s16
      %p217 = scmp.lt.s32.totalorder %s216, 127
      %s218 = scalar_select %p217, %s216, 127
      %s219 = smul.addr %s218, 4
      %s220 = scalar_lea.vmem %s0, %s219
      %s221 = smul.u32 32, %s16
      %s222 = smul.u32 32, %s16
      %p223 = scmp.lt.s32.totalorder %s222, 127
      %s224 = scalar_select %p223, %s222, 127
      %s225 = smul.addr %s224, 8
      %s226 = scalar_lea.vmem %s5, %s225
      %s227 = smul.u32 32, %s16
      %v229 = vld [vmem:[%s220] sm:$0xf]
      %v230 = vld [vmem:[%s220 + $0x4] sm:$0xf]
      %v231 = vld [vmem:[%s220 + $0x8] sm:$0xf]
      %v232 = vld [vmem:[%s220 + $0xc] sm:$0xf]
      %v233 = vld [vmem:[%s220 + $0x10] sm:$0xf]
      %v234 = vld [vmem:[%s220 + $0x14] sm:$0xf]
      %v235 = vld [vmem:[%s220 + $0x18] sm:$0xf]
      %v236 = vld [vmem:[%s220 + $0x1c] sm:$0xf]
      %v237 = vld [vmem:[%s220 + $0x20] sm:$0xf]
      %v238 = vld [vmem:[%s220 + $0x24] sm:$0xf]
      %v239 = vld [vmem:[%s220 + $0x28] sm:$0xf]
      %v240 = vld [vmem:[%s220 + $0x2c] sm:$0xf]
      %v241 = vld [vmem:[%s220 + $0x30] sm:$0xf]
      %v242 = vld [vmem:[%s220 + $0x34] sm:$0xf]
      %v243 = vld [vmem:[%s220 + $0x38] sm:$0xf]
      %v244 = vld [vmem:[%s220 + $0x3c] sm:$0xf]
      %v245 = vld [vmem:[%s220 + $0x40] sm:$0xf]
      %v246 = vld [vmem:[%s220 + $0x44] sm:$0xf]
      %v247 = vld [vmem:[%s220 + $0x48] sm:$0xf]
      %v248 = vld [vmem:[%s220 + $0x4c] sm:$0xf]
      %v249 = vld [vmem:[%s220 + $0x50] sm:$0xf]
      %v250 = vld [vmem:[%s220 + $0x54] sm:$0xf]
      %v251 = vld [vmem:[%s220 + $0x58] sm:$0xf]
      %v252 = vld [vmem:[%s220 + $0x5c] sm:$0xf]
      %v253 = vld [vmem:[%s220 + $0x60] sm:$0xf]
      %v254 = vld [vmem:[%s220 + $0x64] sm:$0xf]
      %v255 = vld [vmem:[%s220 + $0x68] sm:$0xf]
      %v256 = vld [vmem:[%s220 + $0x6c] sm:$0xf]
      %v257 = vld [vmem:[%s220 + $0x70] sm:$0xf]
      %v258 = vld [vmem:[%s220 + $0x74] sm:$0xf]
      %v259 = vld [vmem:[%s220 + $0x78] sm:$0xf]
      %v260 = vld [vmem:[%s220 + $0x7c] sm:$0xf]
      %v261 = vld [vmem:[%s1] sm:$0xf]
      %v262 = vld [vmem:[%s1 + $0x4] sm:$0xf]
      %v263 = vld [vmem:[%s1 + $0x8] sm:$0xf]
      %v264 = vld [vmem:[%s1 + $0xc] sm:$0xf]
      %v265 = vld [vmem:[%s1 + $0x10] sm:$0xf]
      %v266 = vld [vmem:[%s1 + $0x14] sm:$0xf]
      %v267 = vld [vmem:[%s1 + $0x18] sm:$0xf]
      %v268 = vld [vmem:[%s1 + $0x1c] sm:$0xf]
      %v269 = vld [vmem:[%s2] sm:$0x1]
      %v271 = vlaneseq
      %v272 = vshrl.u32 %v271, 7
      %v273 = vsub.s32 0, %v272
      %v274 = vrot.slane %v269, %v273
      %v308 = vunpack.c.l.b16 %v229
      %v309 = vunpack.c.l.b16 %v230
      %v310 = vunpack.c.l.b16 %v231
      %v311 = vunpack.c.l.b16 %v232
      %v312 = vunpack.c.l.b16 %v233
      %v313 = vunpack.c.l.b16 %v234
      %v314 = vunpack.c.l.b16 %v235
      %v315 = vunpack.c.l.b16 %v236
      %v316 = vunpack.c.l.b16 %v237
      %v317 = vunpack.c.l.b16 %v238
      %v318 = vunpack.c.l.b16 %v239
      %v319 = vunpack.c.l.b16 %v240
      %v320 = vunpack.c.l.b16 %v241
      %v321 = vunpack.c.l.b16 %v242
      %v322 = vunpack.c.l.b16 %v243
      %v323 = vunpack.c.l.b16 %v244
      %v324 = vunpack.c.l.b16 %v245
      %v325 = vunpack.c.l.b16 %v246
      %v326 = vunpack.c.l.b16 %v247
      %v327 = vunpack.c.l.b16 %v248
      %v328 = vunpack.c.l.b16 %v249
      %v329 = vunpack.c.l.b16 %v250
      %v330 = vunpack.c.l.b16 %v251
      %v331 = vunpack.c.l.b16 %v252
      %v332 = vunpack.c.l.b16 %v253
      %v333 = vunpack.c.l.b16 %v254
      %v334 = vunpack.c.l.b16 %v255
      %v335 = vunpack.c.l.b16 %v256
      %v336 = vunpack.c.l.b16 %v257
      %v337 = vunpack.c.l.b16 %v258
      %v338 = vunpack.c.l.b16 %v259
      %v339 = vunpack.c.l.b16 %v260
      %v340 = vpack.c.b16 %v309, %v308
      %v341 = vpack.c.b16 %v311, %v310
      %v342 = vpack.c.b16 %v313, %v312
      %v343 = vpack.c.b16 %v315, %v314
      %v344 = vpack.c.b16 %v317, %v316
      %v345 = vpack.c.b16 %v319, %v318
      %v346 = vpack.c.b16 %v321, %v320
      %v347 = vpack.c.b16 %v323, %v322
      %v348 = vpack.c.b16 %v325, %v324
      %v349 = vpack.c.b16 %v327, %v326
      %v350 = vpack.c.b16 %v329, %v328
      %v351 = vpack.c.b16 %v331, %v330
      %v352 = vpack.c.b16 %v333, %v332
      %v353 = vpack.c.b16 %v335, %v334
      %v354 = vpack.c.b16 %v337, %v336
      %v355 = vpack.c.b16 %v339, %v338
      %v364 = vunpack.c.l.b16 %v261
      %v365 = vunpack.c.l.b16 %v262
      %v366 = vunpack.c.l.b16 %v263
      %v367 = vunpack.c.l.b16 %v264
      %v368 = vunpack.c.l.b16 %v265
      %v369 = vunpack.c.l.b16 %v266
      %v370 = vunpack.c.l.b16 %v267
      %v371 = vunpack.c.l.b16 %v268
      %v372 = vpack.c.b16 %v365, %v364
      %v373 = vpack.c.b16 %v367, %v366
      %v374 = vpack.c.b16 %v369, %v368
      %v375 = vpack.c.b16 %v371, %v370
      %vm380 = vcmask 523264
      %v382 = vsel %vm380, %v340, 0
      %v385 = vsel %vm380, %v341, 0
      %v388 = vsel %vm380, %v342, 0
      %v391 = vsel %vm380, %v343, 0
      %v394 = vsel %vm380, %v344, 0
      %v397 = vsel %vm380, %v345, 0
      %v400 = vsel %vm380, %v346, 0
      %v403 = vsel %vm380, %v347, 0
      %v406 = vsel %vm380, %v348, 0
      %v409 = vsel %vm380, %v349, 0
      %v412 = vsel %vm380, %v350, 0
      %v415 = vsel %vm380, %v351, 0
      %v418 = vsel %vm380, %v352, 0
      %v421 = vsel %vm380, %v353, 0
      %v424 = vsel %vm380, %v354, 0
      %v427 = vsel %vm380, %v355, 0
      %429 = vmatprep.subr.bf16.mxu0 0
      %430 = vmatpush1.bf16.msra.mxu0 %v372
      %431 = vmatprep.subr.bf16.mxu0 0
      %432 = vmatpush1.bf16.msra.mxu0 %v373
      %433 = vmatprep.subr.bf16.mxu0 0
      %434 = vmatpush1.bf16.msra.mxu0 %v374
      %435 = vmatprep.subr.bf16.mxu0 0
      %436 = vmatpush1.bf16.msra.mxu0 %v375
      %437 = vmatprep.subr.bf16.mxu0 0
      %438 = vmatpush1.bf16.msra.mxu0 0
      %439 = vmatprep.subr.bf16.mxu0 0
      %440 = vmatpush1.bf16.msra.mxu0 0
      %441 = vmatprep.subr.bf16.mxu0 0
      %442 = vmatpush1.bf16.msra.mxu0 0
      %443 = vmatprep.subr.bf16.mxu0 0
      %444 = vmatpush1.bf16.msra.mxu0 0
      %445 = vmatprep.subr.bf16.mxu0 0
      %446 = vmatpush1.bf16.msra.mxu0 0
      %447 = vmatprep.subr.bf16.mxu0 0
      %448 = vmatpush1.bf16.msra.mxu0 0
      %449 = vmatprep.subr.bf16.mxu0 0
      %450 = vmatpush1.bf16.msra.mxu0 0
      %451 = vmatprep.subr.bf16.mxu0 0
      %452 = vmatpush1.bf16.msra.mxu0 0
      %453 = vmatprep.subr.bf16.mxu0 0
      %454 = vmatpush1.bf16.msra.mxu0 0
      %455 = vmatprep.subr.bf16.mxu0 0
      %456 = vmatpush1.bf16.msra.mxu0 0
      %457 = vmatprep.subr.bf16.mxu0 0
      %458 = vmatpush1.bf16.msra.mxu0 0
      %459 = vmatprep.subr.bf16.mxu0 0
      %460 = vmatpush1.bf16.msra.mxu0 0
      %461 = vmatprep.mubr.bf16.mxu0 0
      %462 = vmatmul.mubr.bf16.gmra.mrb[0].mxu0 %v382
      %v463 = vpop.f32.mrb[0].mxu0
      %v464 = vadd.f32 %v274, %v463
      %v465 = vpop.f32.mrb[0].mxu0
      %v466 = vpop.f32.mrb[0].mxu0
      %v467 = vadd.f32 %v274, %v466
      %v468 = vpop.f32.mrb[0].mxu0
      %469 = vmatprep.mubr.bf16.mxu0 0
      %470 = vmatmul.mubr.bf16.gmra.mrb[0].mxu0 %v385
      %v471 = vpop.f32.mrb[0].mxu0
      %v472 = vadd.f32 %v274, %v471
      %v473 = vpop.f32.mrb[0].mxu0
      %v474 = vpop.f32.mrb[0].mxu0
      %v475 = vadd.f32 %v274, %v474
      %v476 = vpop.f32.mrb[0].mxu0
      %477 = vmatprep.mubr.bf16.mxu0 0
      %478 = vmatmul.mubr.bf16.gmra.mrb[0].mxu0 %v388
      %v479 = vpop.f32.mrb[0].mxu0
      %v480 = vadd.f32 %v274, %v479
      %v481 = vpop.f32.mrb[0].mxu0
      %v482 = vpop.f32.mrb[0].mxu0
      %v483 = vadd.f32 %v274, %v482
      %v484 = vpop.f32.mrb[0].mxu0
      %485 = vmatprep.mubr.bf16.mxu0 0
      %486 = vmatmul.mubr.bf16.gmra.mrb[0].mxu0 %v391
      %v487 = vpop.f32.mrb[0].mxu0
      %v488 = vadd.f32 %v274, %v487
      %v489 = vpop.f32.mrb[0].mxu0
      %v490 = vpop.f32.mrb[0].mxu0
      %v491 = vadd.f32 %v274, %v490
      %v492 = vpop.f32.mrb[0].mxu0
      %493 = vmatprep.mubr.bf16.mxu0 0
      %494 = vmatmul.mubr.bf16.gmra.mrb[0].mxu0 %v394
      %v495 = vpop.f32.mrb[0].mxu0
      %v496 = vadd.f32 %v274, %v495
      %v497 = vpop.f32.mrb[0].mxu0
      %v498 = vpop.f32.mrb[0].mxu0
      %v499 = vadd.f32 %v274, %v498
      %v500 = vpop.f32.mrb[0].mxu0
      %501 = vmatprep.mubr.bf16.mxu0 0
      %502 = vmatmul.mubr.bf16.gmra.mrb[0].mxu0 %v397
      %v503 = vpop.f32.mrb[0].mxu0
      %v504 = vadd.f32 %v274, %v503
      %v505 = vpop.f32.mrb[0].mxu0
      %v506 = vpop.f32.mrb[0].mxu0
      %v507 = vadd.f32 %v274, %v506
      %v508 = vpop.f32.mrb[0].mxu0
      %509 = vmatprep.mubr.bf16.mxu0 0
      %510 = vmatmul.mubr.bf16.gmra.mrb[0].mxu0 %v400
      %v511 = vpop.f32.mrb[0].mxu0
      %v512 = vadd.f32 %v274, %v511
      %v513 = vpop.f32.mrb[0].mxu0
      %v514 = vpop.f32.mrb[0].mxu0
      %v515 = vadd.f32 %v274, %v514
      %v516 = vpop.f32.mrb[0].mxu0
      %517 = vmatprep.mubr.bf16.mxu0 0
      %518 = vmatmul.mubr.bf16.gmra.mrb[0].mxu0 %v403
      %v519 = vpop.f32.mrb[0].mxu0
      %v520 = vadd.f32 %v274, %v519
      %v521 = vpop.f32.mrb[0].mxu0
      %v522 = vpop.f32.mrb[0].mxu0
      %v523 = vadd.f32 %v274, %v522
      %v524 = vpop.f32.mrb[0].mxu0
      %525 = vmatprep.mubr.bf16.mxu0 0
      %526 = vmatmul.mubr.bf16.gmra.mrb[0].mxu0 %v406
      %v527 = vpop.f32.mrb[0].mxu0
      %v528 = vadd.f32 %v274, %v527
      %v529 = vpop.f32.mrb[0].mxu0
      %v530 = vpop.f32.mrb[0].mxu0
      %v531 = vadd.f32 %v274, %v530
      %v532 = vpop.f32.mrb[0].mxu0
      %533 = vmatprep.mubr.bf16.mxu0 0
      %534 = vmatmul.mubr.bf16.gmra.mrb[0].mxu0 %v409
      %v535 = vpop.f32.mrb[0].mxu0
      %v536 = vadd.f32 %v274, %v535
      %v537 = vpop.f32.mrb[0].mxu0
      %v538 = vpop.f32.mrb[0].mxu0
      %v539 = vadd.f32 %v274, %v538
      %v540 = vpop.f32.mrb[0].mxu0
      %541 = vmatprep.mubr.bf16.mxu0 0
      %542 = vmatmul.mubr.bf16.gmra.mrb[0].mxu0 %v412
      %v543 = vpop.f32.mrb[0].mxu0
      %v544 = vadd.f32 %v274, %v543
      %v545 = vpop.f32.mrb[0].mxu0
      %v546 = vpop.f32.mrb[0].mxu0
      %v547 = vadd.f32 %v274, %v546
      %v548 = vpop.f32.mrb[0].mxu0
      %549 = vmatprep.mubr.bf16.mxu0 0
      %550 = vmatmul.mubr.bf16.gmra.mrb[0].mxu0 %v415
      %v551 = vpop.f32.mrb[0].mxu0
      %v552 = vadd.f32 %v274, %v551
      %v553 = vpop.f32.mrb[0].mxu0
      %v554 = vpop.f32.mrb[0].mxu0
      %v555 = vadd.f32 %v274, %v554
      %v556 = vpop.f32.mrb[0].mxu0
      %557 = vmatprep.mubr.bf16.mxu0 0
      %558 = vmatmul.mubr.bf16.gmra.mrb[0].mxu0 %v418
      %v559 = vpop.f32.mrb[0].mxu0
      %v560 = vadd.f32 %v274, %v559
      %v561 = vpop.f32.mrb[0].mxu0
      %v562 = vpop.f32.mrb[0].mxu0
      %v563 = vadd.f32 %v274, %v562
      %v564 = vpop.f32.mrb[0].mxu0
      %565 = vmatprep.mubr.bf16.mxu0 0
      %566 = vmatmul.mubr.bf16.gmra.mrb[0].mxu0 %v421
      %v567 = vpop.f32.mrb[0].mxu0
      %v568 = vadd.f32 %v274, %v567
      %v569 = vpop.f32.mrb[0].mxu0
      %v570 = vpop.f32.mrb[0].mxu0
      %v571 = vadd.f32 %v274, %v570
      %v572 = vpop.f32.mrb[0].mxu0
      %573 = vmatprep.mubr.bf16.mxu0 0
      %574 = vmatmul.mubr.bf16.gmra.mrb[0].mxu0 %v424
      %v575 = vpop.f32.mrb[0].mxu0
      %v576 = vadd.f32 %v274, %v575
      %v577 = vpop.f32.mrb[0].mxu0
      %v578 = vpop.f32.mrb[0].mxu0
      %v579 = vadd.f32 %v274, %v578
      %v580 = vpop.f32.mrb[0].mxu0
      %581 = vmatprep.mubr.bf16.mxu0 0
      %582 = vmatmul.mubr.bf16.gmra.mrb[0].mxu0 %v427
      %v583 = vpop.f32.mrb[0].mxu0
      %v584 = vadd.f32 %v274, %v583
      %v585 = vpop.f32.mrb[0].mxu0
      %v586 = vpop.f32.mrb[0].mxu0
      %v587 = vadd.f32 %v274, %v586
      %v588 = vpop.f32.mrb[0].mxu0
      %589 = vdwg.mxu0
      %v590 = vxor.u32 %v464, 2147483648
      %v591 = vxor.u32 %v467, 2147483648
      %v592 = vxor.u32 %v472, 2147483648
      %v593 = vxor.u32 %v475, 2147483648
      %v594 = vxor.u32 %v480, 2147483648
      %v595 = vxor.u32 %v483, 2147483648
      %v596 = vxor.u32 %v488, 2147483648
      %v597 = vxor.u32 %v491, 2147483648
      %v598 = vxor.u32 %v496, 2147483648
      %v599 = vxor.u32 %v499, 2147483648
      %v600 = vxor.u32 %v504, 2147483648
      %v601 = vxor.u32 %v507, 2147483648
      %v602 = vxor.u32 %v512, 2147483648
      %v603 = vxor.u32 %v515, 2147483648
      %v604 = vxor.u32 %v520, 2147483648
      %v605 = vxor.u32 %v523, 2147483648
      %v606 = vxor.u32 %v528, 2147483648
      %v607 = vxor.u32 %v531, 2147483648
      %v608 = vxor.u32 %v536, 2147483648
      %v609 = vxor.u32 %v539, 2147483648
      %v610 = vxor.u32 %v544, 2147483648
      %v611 = vxor.u32 %v547, 2147483648
      %v612 = vxor.u32 %v552, 2147483648
      %v613 = vxor.u32 %v555, 2147483648
      %v614 = vxor.u32 %v560, 2147483648
      %v615 = vxor.u32 %v563, 2147483648
      %v616 = vxor.u32 %v568, 2147483648
      %v617 = vxor.u32 %v571, 2147483648
      %v618 = vxor.u32 %v576, 2147483648
      %v619 = vxor.u32 %v579, 2147483648
      %v620 = vxor.u32 %v584, 2147483648
      %v621 = vxor.u32 %v587, 2147483648
      %v622 = vmul.f32 %v590, 1.442695
      %v623 = vpow.pop %v622
      %v624 = vmul.f32 %v591, 1.442695
      %v625 = vpow.pop %v624
      %v626 = vmul.f32 %v592, 1.442695
      %v627 = vpow.pop %v626
      %v628 = vmul.f32 %v593, 1.442695
      %v629 = vpow.pop %v628
      %v630 = vmul.f32 %v594, 1.442695
      %v631 = vpow.pop %v630
      %v632 = vmul.f32 %v595, 1.442695
      %v633 = vpow.pop %v632
      %v634 = vmul.f32 %v596, 1.442695
      %v635 = vpow.pop %v634
      %v636 = vmul.f32 %v597, 1.442695
      %v637 = vpow.pop %v636
      %v638 = vmul.f32 %v598, 1.442695
      %v639 = vpow.pop %v638
      %v640 = vmul.f32 %v599, 1.442695
      %v641 = vpow.pop %v640
      %v642 = vmul.f32 %v600, 1.442695
      %v643 = vpow.pop %v642
      %v644 = vmul.f32 %v601, 1.442695
      %v645 = vpow.pop %v644
      %v646 = vmul.f32 %v602, 1.442695
      %v647 = vpow.pop %v646
      %v648 = vmul.f32 %v603, 1.442695
      %v649 = vpow.pop %v648
      %v650 = vmul.f32 %v604, 1.442695
      %v651 = vpow.pop %v650
      %v652 = vmul.f32 %v605, 1.442695
      %v653 = vpow.pop %v652
      %v654 = vmul.f32 %v606, 1.442695
      %v655 = vpow.pop %v654
      %v656 = vmul.f32 %v607, 1.442695
      %v657 = vpow.pop %v656
      %v658 = vmul.f32 %v608, 1.442695
      %v659 = vpow.pop %v658
      %v660 = vmul.f32 %v609, 1.442695
      %v661 = vpow.pop %v660
      %v662 = vmul.f32 %v610, 1.442695
      %v663 = vpow.pop %v662
      %v664 = vmul.f32 %v611, 1.442695
      %v665 = vpow.pop %v664
      %v666 = vmul.f32 %v612, 1.442695
      %v667 = vpow.pop %v666
      %v668 = vmul.f32 %v613, 1.442695
      %v669 = vpow.pop %v668
      %v670 = vmul.f32 %v614, 1.442695
      %v671 = vpow.pop %v670
      %v672 = vmul.f32 %v615, 1.442695
      %v673 = vpow.pop %v672
      %v674 = vmul.f32 %v616, 1.442695
      %v675 = vpow.pop %v674
      %v676 = vmul.f32 %v617, 1.442695
      %v677 = vpow.pop %v676
      %v678 = vmul.f32 %v618, 1.442695
      %v679 = vpow.pop %v678
      %v680 = vmul.f32 %v619, 1.442695
      %v681 = vpow.pop %v680
      %v682 = vmul.f32 %v620, 1.442695
      %v683 = vpow.pop %v682
      %v684 = vmul.f32 %v621, 1.442695
      %v685 = vpow.pop %v684
      %v686 = vadd.f32 %v623, 1.0
      %v687 = vadd.f32 %v625, 1.0
      %v688 = vadd.f32 %v627, 1.0
      %v689 = vadd.f32 %v629, 1.0
      %v690 = vadd.f32 %v631, 1.0
      %v691 = vadd.f32 %v633, 1.0
      %v692 = vadd.f32 %v635, 1.0
      %v693 = vadd.f32 %v637, 1.0
      %v694 = vadd.f32 %v639, 1.0
      %v695 = vadd.f32 %v641, 1.0
      %v696 = vadd.f32 %v643, 1.0
      %v697 = vadd.f32 %v645, 1.0
      %v698 = vadd.f32 %v647, 1.0
      %v699 = vadd.f32 %v649, 1.0
      %v700 = vadd.f32 %v651, 1.0
      %v701 = vadd.f32 %v653, 1.0
      %v702 = vadd.f32 %v655, 1.0
      %v703 = vadd.f32 %v657, 1.0
      %v704 = vadd.f32 %v659, 1.0
      %v705 = vadd.f32 %v661, 1.0
      %v706 = vadd.f32 %v663, 1.0
      %v707 = vadd.f32 %v665, 1.0
      %v708 = vadd.f32 %v667, 1.0
      %v709 = vadd.f32 %v669, 1.0
      %v710 = vadd.f32 %v671, 1.0
      %v711 = vadd.f32 %v673, 1.0
      %v712 = vadd.f32 %v675, 1.0
      %v713 = vadd.f32 %v677, 1.0
      %v714 = vadd.f32 %v679, 1.0
      %v715 = vadd.f32 %v681, 1.0
      %v716 = vadd.f32 %v683, 1.0
      %v717 = vadd.f32 %v685, 1.0
      %v718 = vrcp.pop %v686
      %v719 = vmul.f32 1.0, %v718
      %v720 = vrcp.pop %v687
      %v721 = vmul.f32 1.0, %v720
      %v722 = vrcp.pop %v688
      %v723 = vmul.f32 1.0, %v722
      %v724 = vrcp.pop %v689
      %v725 = vmul.f32 1.0, %v724
      %v726 = vrcp.pop %v690
      %v727 = vmul.f32 1.0, %v726
      %v728 = vrcp.pop %v691
      %v729 = vmul.f32 1.0, %v728
      %v730 = vrcp.pop %v692
      %v731 = vmul.f32 1.0, %v730
      %v732 = vrcp.pop %v693
      %v733 = vmul.f32 1.0, %v732
      %v734 = vrcp.pop %v694
      %v735 = vmul.f32 1.0, %v734
      %v736 = vrcp.pop %v695
      %v737 = vmul.f32 1.0, %v736
      %v738 = vrcp.pop %v696
      %v739 = vmul.f32 1.0, %v738
      %v740 = vrcp.pop %v697
      %v741 = vmul.f32 1.0, %v740
      %v742 = vrcp.pop %v698
      %v743 = vmul.f32 1.0, %v742
      %v744 = vrcp.pop %v699
      %v745 = vmul.f32 1.0, %v744
      %v746 = vrcp.pop %v700
      %v747 = vmul.f32 1.0, %v746
      %v748 = vrcp.pop %v701
      %v749 = vmul.f32 1.0, %v748
      %v750 = vrcp.pop %v702
      %v751 = vmul.f32 1.0, %v750
      %v752 = vrcp.pop %v703
      %v753 = vmul.f32 1.0, %v752
      %v754 = vrcp.pop %v704
      %v755 = vmul.f32 1.0, %v754
      %v756 = vrcp.pop %v705
      %v757 = vmul.f32 1.0, %v756
      %v758 = vrcp.pop %v706
      %v759 = vmul.f32 1.0, %v758
      %v760 = vrcp.pop %v707
      %v761 = vmul.f32 1.0, %v760
      %v762 = vrcp.pop %v708
      %v763 = vmul.f32 1.0, %v762
      %v764 = vrcp.pop %v709
      %v765 = vmul.f32 1.0, %v764
      %v766 = vrcp.pop %v710
      %v767 = vmul.f32 1.0, %v766
      %v768 = vrcp.pop %v711
      %v769 = vmul.f32 1.0, %v768
      %v770 = vrcp.pop %v712
      %v771 = vmul.f32 1.0, %v770
      %v772 = vrcp.pop %v713
      %v773 = vmul.f32 1.0, %v772
      %v774 = vrcp.pop %v714
      %v775 = vmul.f32 1.0, %v774
      %v776 = vrcp.pop %v715
      %v777 = vmul.f32 1.0, %v776
      %v778 = vrcp.pop %v716
      %v779 = vmul.f32 1.0, %v778
      %v780 = vrcp.pop %v717
      %v781 = vmul.f32 1.0, %v780
      %v782 = vpack.c.bf16 %v721, %v719
      %v783 = vpack.c.bf16 %v725, %v723
      %v784 = vpack.c.bf16 %v729, %v727
      %v785 = vpack.c.bf16 %v733, %v731
      %v786 = vpack.c.bf16 %v737, %v735
      %v787 = vpack.c.bf16 %v741, %v739
      %v788 = vpack.c.bf16 %v745, %v743
      %v789 = vpack.c.bf16 %v749, %v747
      %v790 = vpack.c.bf16 %v753, %v751
      %v791 = vpack.c.bf16 %v757, %v755
      %v792 = vpack.c.bf16 %v761, %v759
      %v793 = vpack.c.bf16 %v765, %v763
      %v794 = vpack.c.bf16 %v769, %v767
      %v795 = vpack.c.bf16 %v773, %v771
      %v796 = vpack.c.bf16 %v777, %v775
      %v797 = vpack.c.bf16 %v781, %v779
      %v798 = vld [vmem:[%s3] sm:$0xf]
      %v799 = vld [vmem:[%s3 + $0x4] sm:$0xf]
      %v800 = vld [vmem:[%s3 + $0x8] sm:$0xf]
      %v801 = vld [vmem:[%s3 + $0xc] sm:$0xf]
      %v802 = vld [vmem:[%s3 + $0x10] sm:$0xf]
      %v803 = vld [vmem:[%s3 + $0x14] sm:$0xf]
      %v804 = vld [vmem:[%s3 + $0x18] sm:$0xf]
      %v805 = vld [vmem:[%s3 + $0x1c] sm:$0xf]
      %v806 = vld [vmem:[%s3 + $0x20] sm:$0xf]
      %v807 = vld [vmem:[%s3 + $0x24] sm:$0xf]
      %v808 = vld [vmem:[%s3 + $0x28] sm:$0xf]
      %v809 = vld [vmem:[%s3 + $0x2c] sm:$0xf]
      %v810 = vld [vmem:[%s3 + $0x30] sm:$0xf]
      %v811 = vld [vmem:[%s3 + $0x34] sm:$0xf]
      %v812 = vld [vmem:[%s3 + $0x38] sm:$0xf]
      %v813 = vld [vmem:[%s3 + $0x3c] sm:$0xf]
      %v814 = vld [vmem:[%s4] sm:$0x1]
      %v816 = vlaneseq
      %v817 = vshrl.u32 %v816, 7
      %v818 = vsub.s32 0, %v817
      %v819 = vrot.slane %v814, %v818
      %v837 = vunpack.c.l.b16 %v798
      %v838 = vunpack.c.l.b16 %v799
      %v839 = vunpack.c.l.b16 %v800
      %v840 = vunpack.c.l.b16 %v801
      %v841 = vunpack.c.l.b16 %v802
      %v842 = vunpack.c.l.b16 %v803
      %v843 = vunpack.c.l.b16 %v804
      %v844 = vunpack.c.l.b16 %v805
      %v845 = vunpack.c.l.b16 %v806
      %v846 = vunpack.c.l.b16 %v807
      %v847 = vunpack.c.l.b16 %v808
      %v848 = vunpack.c.l.b16 %v809
      %v849 = vunpack.c.l.b16 %v810
      %v850 = vunpack.c.l.b16 %v811
      %v851 = vunpack.c.l.b16 %v812
      %v852 = vunpack.c.l.b16 %v813
      %v853 = vpack.c.b16 %v838, %v837
      %v854 = vpack.c.b16 %v840, %v839
      %v855 = vpack.c.b16 %v842, %v841
      %v856 = vpack.c.b16 %v844, %v843
      %v857 = vpack.c.b16 %v846, %v845
      %v858 = vpack.c.b16 %v848, %v847
      %v859 = vpack.c.b16 %v850, %v849
      %v860 = vpack.c.b16 %v852, %v851
      %869 = vmatprep.subr.bf16.mxu0 0
      %870 = vmatpush1.bf16.msra.mxu0 %v853
      %871 = vmatprep.subr.bf16.mxu0 0
      %872 = vmatpush1.bf16.msra.mxu0 %v854
      %873 = vmatprep.subr.bf16.mxu0 0
      %874 = vmatpush1.bf16.msra.mxu0 %v855
      %875 = vmatprep.subr.bf16.mxu0 0
      %876 = vmatpush1.bf16.msra.mxu0 %v856
      %877 = vmatprep.subr.bf16.mxu0 0
      %878 = vmatpush1.bf16.msra.mxu0 %v857
      %879 = vmatprep.subr.bf16.mxu0 0
      %880 = vmatpush1.bf16.msra.mxu0 %v858
      %881 = vmatprep.subr.bf16.mxu0 0
      %882 = vmatpush1.bf16.msra.mxu0 %v859
      %883 = vmatprep.subr.bf16.mxu0 0
      %884 = vmatpush1.bf16.msra.mxu0 %v860
      %885 = vmatprep.subr.bf16.mxu0 0
      %886 = vmatpush1.bf16.msra.mxu0 0
      %887 = vmatprep.subr.bf16.mxu0 0
      %888 = vmatpush1.bf16.msra.mxu0 0
      %889 = vmatprep.subr.bf16.mxu0 0
      %890 = vmatpush1.bf16.msra.mxu0 0
      %891 = vmatprep.subr.bf16.mxu0 0
      %892 = vmatpush1.bf16.msra.mxu0 0
      %893 = vmatprep.subr.bf16.mxu0 0
      %894 = vmatpush1.bf16.msra.mxu0 0
      %895 = vmatprep.subr.bf16.mxu0 0
      %896 = vmatpush1.bf16.msra.mxu0 0
      %897 = vmatprep.subr.bf16.mxu0 0
      %898 = vmatpush1.bf16.msra.mxu0 0
      %899 = vmatprep.subr.bf16.mxu0 0
      %900 = vmatpush1.bf16.msra.mxu0 0
      %901 = vmatprep.mubr.bf16.mxu0 0
      %902 = vmatmul.mubr.bf16.gmra.mrb[0].mxu0 %v782
      %v903 = vpop.f32.mrb[0].mxu0
      %v904 = vadd.f32 %v819, %v903
      %v905 = vpop.f32.mrb[0].mxu0
      %v906 = vpop.f32.mrb[0].mxu0
      %v907 = vadd.f32 %v819, %v906
      %v908 = vpop.f32.mrb[0].mxu0
      %909 = vmatprep.mubr.bf16.mxu0 0
      %910 = vmatmul.mubr.bf16.gmra.mrb[0].mxu0 %v783
      %v911 = vpop.f32.mrb[0].mxu0
      %v912 = vadd.f32 %v819, %v911
      %v913 = vpop.f32.mrb[0].mxu0
      %v914 = vpop.f32.mrb[0].mxu0
      %v915 = vadd.f32 %v819, %v914
      %v916 = vpop.f32.mrb[0].mxu0
      %917 = vmatprep.mubr.bf16.mxu0 0
      %918 = vmatmul.mubr.bf16.gmra.mrb[0].mxu0 %v784
      %v919 = vpop.f32.mrb[0].mxu0
      %v920 = vadd.f32 %v819, %v919
      %v921 = vpop.f32.mrb[0].mxu0
      %v922 = vpop.f32.mrb[0].mxu0
      %v923 = vadd.f32 %v819, %v922
      %v924 = vpop.f32.mrb[0].mxu0
      %925 = vmatprep.mubr.bf16.mxu0 0
      %926 = vmatmul.mubr.bf16.gmra.mrb[0].mxu0 %v785
      %v927 = vpop.f32.mrb[0].mxu0
      %v928 = vadd.f32 %v819, %v927
      %v929 = vpop.f32.mrb[0].mxu0
      %v930 = vpop.f32.mrb[0].mxu0
      %v931 = vadd.f32 %v819, %v930
      %v932 = vpop.f32.mrb[0].mxu0
      %933 = vmatprep.mubr.bf16.mxu0 0
      %934 = vmatmul.mubr.bf16.gmra.mrb[0].mxu0 %v786
      %v935 = vpop.f32.mrb[0].mxu0
      %v936 = vadd.f32 %v819, %v935
      %v937 = vpop.f32.mrb[0].mxu0
      %v938 = vpop.f32.mrb[0].mxu0
      %v939 = vadd.f32 %v819, %v938
      %v940 = vpop.f32.mrb[0].mxu0
      %941 = vmatprep.mubr.bf16.mxu0 0
      %942 = vmatmul.mubr.bf16.gmra.mrb[0].mxu0 %v787
      %v943 = vpop.f32.mrb[0].mxu0
      %v944 = vadd.f32 %v819, %v943
      %v945 = vpop.f32.mrb[0].mxu0
      %v946 = vpop.f32.mrb[0].mxu0
      %v947 = vadd.f32 %v819, %v946
      %v948 = vpop.f32.mrb[0].mxu0
      %949 = vmatprep.mubr.bf16.mxu0 0
      %950 = vmatmul.mubr.bf16.gmra.mrb[0].mxu0 %v788
      %v951 = vpop.f32.mrb[0].mxu0
      %v952 = vadd.f32 %v819, %v951
      %v953 = vpop.f32.mrb[0].mxu0
      %v954 = vpop.f32.mrb[0].mxu0
      %v955 = vadd.f32 %v819, %v954
      %v956 = vpop.f32.mrb[0].mxu0
      %957 = vmatprep.mubr.bf16.mxu0 0
      %958 = vmatmul.mubr.bf16.gmra.mrb[0].mxu0 %v789
      %v959 = vpop.f32.mrb[0].mxu0
      %v960 = vadd.f32 %v819, %v959
      %v961 = vpop.f32.mrb[0].mxu0
      %v962 = vpop.f32.mrb[0].mxu0
      %v963 = vadd.f32 %v819, %v962
      %v964 = vpop.f32.mrb[0].mxu0
      %965 = vmatprep.mubr.bf16.mxu0 0
      %966 = vmatmul.mubr.bf16.gmra.mrb[0].mxu0 %v790
      %v967 = vpop.f32.mrb[0].mxu0
      %v968 = vadd.f32 %v819, %v967
      %v969 = vpop.f32.mrb[0].mxu0
      %v970 = vpop.f32.mrb[0].mxu0
      %v971 = vadd.f32 %v819, %v970
      %v972 = vpop.f32.mrb[0].mxu0
      %973 = vmatprep.mubr.bf16.mxu0 0
      %974 = vmatmul.mubr.bf16.gmra.mrb[0].mxu0 %v791
      %v975 = vpop.f32.mrb[0].mxu0
      %v976 = vadd.f32 %v819, %v975
      %v977 = vpop.f32.mrb[0].mxu0
      %v978 = vpop.f32.mrb[0].mxu0
      %v979 = vadd.f32 %v819, %v978
      %v980 = vpop.f32.mrb[0].mxu0
      %981 = vmatprep.mubr.bf16.mxu0 0
      %982 = vmatmul.mubr.bf16.gmra.mrb[0].mxu0 %v792
      %v983 = vpop.f32.mrb[0].mxu0
      %v984 = vadd.f32 %v819, %v983
      %v985 = vpop.f32.mrb[0].mxu0
      %v986 = vpop.f32.mrb[0].mxu0
      %v987 = vadd.f32 %v819, %v986
      %v988 = vpop.f32.mrb[0].mxu0
      %989 = vmatprep.mubr.bf16.mxu0 0
      %990 = vmatmul.mubr.bf16.gmra.mrb[0].mxu0 %v793
      %v991 = vpop.f32.mrb[0].mxu0
      %v992 = vadd.f32 %v819, %v991
      %v993 = vpop.f32.mrb[0].mxu0
      %v994 = vpop.f32.mrb[0].mxu0
      %v995 = vadd.f32 %v819, %v994
      %v996 = vpop.f32.mrb[0].mxu0
      %997 = vmatprep.mubr.bf16.mxu0 0
      %998 = vmatmul.mubr.bf16.gmra.mrb[0].mxu0 %v794
      %v999 = vpop.f32.mrb[0].mxu0
      %v1000 = vadd.f32 %v819, %v999
      %v1001 = vpop.f32.mrb[0].mxu0
      %v1002 = vpop.f32.mrb[0].mxu0
      %v1003 = vadd.f32 %v819, %v1002
      %v1004 = vpop.f32.mrb[0].mxu0
      %1005 = vmatprep.mubr.bf16.mxu0 0
      %1006 = vmatmul.mubr.bf16.gmra.mrb[0].mxu0 %v795
      %v1007 = vpop.f32.mrb[0].mxu0
      %v1008 = vadd.f32 %v819, %v1007
      %v1009 = vpop.f32.mrb[0].mxu0
      %v1010 = vpop.f32.mrb[0].mxu0
      %v1011 = vadd.f32 %v819, %v1010
      %v1012 = vpop.f32.mrb[0].mxu0
      %1013 = vmatprep.mubr.bf16.mxu0 0
      %1014 = vmatmul.mubr.bf16.gmra.mrb[0].mxu0 %v796
      %v1015 = vpop.f32.mrb[0].mxu0
      %v1016 = vadd.f32 %v819, %v1015
      %v1017 = vpop.f32.mrb[0].mxu0
      %v1018 = vpop.f32.mrb[0].mxu0
      %v1019 = vadd.f32 %v819, %v1018
      %v1020 = vpop.f32.mrb[0].mxu0
      %1021 = vmatprep.mubr.bf16.mxu0 0
      %1022 = vmatmul.mubr.bf16.gmra.mrb[0].mxu0 %v797
      %v1023 = vpop.f32.mrb[0].mxu0
      %v1024 = vadd.f32 %v819, %v1023
      %v1025 = vpop.f32.mrb[0].mxu0
      %v1026 = vpop.f32.mrb[0].mxu0
      %v1027 = vadd.f32 %v819, %v1026
      %v1028 = vpop.f32.mrb[0].mxu0
      %1029 = vdwg.mxu0
      %vm1030 = vcmask 64512
      %1031 = vst.msk [vmem:[%s226] sm:$0xff] %vm1030, %v904
      %1032 = vst.msk [vmem:[%s226 + $0x8] sm:$0xff] %vm1030, %v907
      %1033 = vst.msk [vmem:[%s226 + $0x10] sm:$0xff] %vm1030, %v912
      %1034 = vst.msk [vmem:[%s226 + $0x18] sm:$0xff] %vm1030, %v915
      %1035 = vst.msk [vmem:[%s226 + $0x20] sm:$0xff] %vm1030, %v920
      %1036 = vst.msk [vmem:[%s226 + $0x28] sm:$0xff] %vm1030, %v923
      %1037 = vst.msk [vmem:[%s226 + $0x30] sm:$0xff] %vm1030, %v928
      %1038 = vst.msk [vmem:[%s226 + $0x38] sm:$0xff] %vm1030, %v931
      %1039 = vst.msk [vmem:[%s226 + $0x40] sm:$0xff] %vm1030, %v936
      %1040 = vst.msk [vmem:[%s226 + $0x48] sm:$0xff] %vm1030, %v939
      %1041 = vst.msk [vmem:[%s226 + $0x50] sm:$0xff] %vm1030, %v944
      %1042 = vst.msk [vmem:[%s226 + $0x58] sm:$0xff] %vm1030, %v947
      %1043 = vst.msk [vmem:[%s226 + $0x60] sm:$0xff] %vm1030, %v952
      %1044 = vst.msk [vmem:[%s226 + $0x68] sm:$0xff] %vm1030, %v955
      %1045 = vst.msk [vmem:[%s226 + $0x70] sm:$0xff] %vm1030, %v960
      %1046 = vst.msk [vmem:[%s226 + $0x78] sm:$0xff] %vm1030, %v963
      %1047 = vst.msk [vmem:[%s226 + $0x80] sm:$0xff] %vm1030, %v968
      %1048 = vst.msk [vmem:[%s226 + $0x88] sm:$0xff] %vm1030, %v971
      %1049 = vst.msk [vmem:[%s226 + $0x90] sm:$0xff] %vm1030, %v976
      %1050 = vst.msk [vmem:[%s226 + $0x98] sm:$0xff] %vm1030, %v979
      %1051 = vst.msk [vmem:[%s226 + $0xa0] sm:$0xff] %vm1030, %v984
      %1052 = vst.msk [vmem:[%s226 + $0xa8] sm:$0xff] %vm1030, %v987
      %1053 = vst.msk [vmem:[%s226 + $0xb0] sm:$0xff] %vm1030, %v992
      %1054 = vst.msk [vmem:[%s226 + $0xb8] sm:$0xff] %vm1030, %v995
      %1055 = vst.msk [vmem:[%s226 + $0xc0] sm:$0xff] %vm1030, %v1000
      %1056 = vst.msk [vmem:[%s226 + $0xc8] sm:$0xff] %vm1030, %v1003
      %1057 = vst.msk [vmem:[%s226 + $0xd0] sm:$0xff] %vm1030, %v1008
      %1058 = vst.msk [vmem:[%s226 + $0xd8] sm:$0xff] %vm1030, %v1011
      %1059 = vst.msk [vmem:[%s226 + $0xe0] sm:$0xff] %vm1030, %v1016
      %1060 = vst.msk [vmem:[%s226 + $0xe8] sm:$0xff] %vm1030, %v1019
      %1061 = vst.msk [vmem:[%s226 + $0xf0] sm:$0xff] %vm1030, %v1024
      %1062 = vst.msk [vmem:[%s226 + $0xf8] sm:$0xff] %vm1030, %v1027
      %s1063 = smul.u32 32, %s16
      %p1064 = scmp.lt.s32.totalorder %s1063, 127
      %s1065 = scalar_select %p1064, %s1063, 127
      %s1066 = smul.addr %s1065, 8
      %s1067 = scalar_lea.vmem %s5, %s1066
      // Predicated region
      $region41: #{tpu_custom_call.1} parent=39 // pred_check
        %p1068 = pneg %p144
      $region42: #{tpu_custom_call.1} parent=39 // pred_check_branch
        %1070 = sbr.rel (%p1068) target = $region44
      $region43: #{tpu_custom_call.1} parent=39 // pred_region
        %s1071 = smul.u32 32, %s16
      $region44: #{tpu_custom_call.1} parent=39 // pred_fallthru
        _
    $region40: #{tpu_custom_call.1} parent=5 // pred_fallthru
      _
    %p1072 = scmp.le.s32.totalorder 2, %s11
    // Predicated region
    $region45: #{tpu_custom_call.1} parent=5 // pred_check
      %p1073 = pneg %p1072
    $region46: #{tpu_custom_call.1} parent=5 // pred_check_branch
      %1075 = sbr.rel (%p1073) target = $region48
    $region47: #{tpu_custom_call.1} parent=5 // pred_region
      %s1076 = ssub.s32 %s11, 2
      // Predicated region
      $region49: #{tpu_custom_call.1} parent=47 // pred_check
        %p1077 = pneg %p150
      $region50: #{tpu_custom_call.1} parent=47 // pred_check_branch
        %1079 = sbr.rel (%p1077) target = $region52
      $region51: #{tpu_custom_call.1} parent=47 // pred_region
        %s1080 = smul.u32 32, %s17
        %p1081 = scmp.lt.s32.totalorder %s1080, 127
        %s1082 = scalar_select %p1081, %s1080, 127
        %s1083 = smul.addr %s1082, 8
        %s1084 = scalar_lea.vmem %s5, %s1083
      $region52: #{tpu_custom_call.1} parent=47 // pred_fallthru
        _
    $region48: #{tpu_custom_call.1} parent=5 // pred_fallthru
      _
  $region6: #{tpu_custom_call.1} parent=0 // loop_footer
    %s15 = sadd.s32 1, %s11
  $region7: #{tpu_custom_call.1} parent=0 // loop_footer_branch
    %10 = sbr.rel target = $region3
  $region8: #{tpu_custom_call.1} parent=0 // loop_exit
    _

</llo_original>
